<compile_context>
chip_gen: v7x
topology: tpu7x:2x2x1
jax: 0.10.0
libtpu: 0.0.40
codegen_flags: <defaults>
</compile_context>

<pallas_src>
import jax
import jax.numpy as jnp
import numpy as np
from jax.experimental import pallas as pl
from jax.experimental.pallas import tpu as pltpu

C_IN, C_OUT, KH, KW = 2, 3, 5, 7


def model_kernel(w_ref, p_ref, out_ref):
    """Bare fused MXU contraction: conv1*3 + conv2/other + bias + pad1 band.

    w_ref:   VMEM (C_OUT, 2*C_IN*KH*KW + 2)  pre-scaled weights + bias/pad1 cols
    p_ref:   VMEM (2*C_IN*KH*KW + 2, HW)     im2col patches + ones/mask rows
    out_ref: VMEM (C_OUT, HW)                lane-dense output
    """
    out_ref[...] = jnp.dot(w_ref[...], p_ref[...],
                           preferred_element_type=jnp.float32)


def model_forward(x1, x2, weight, bias, other=1.0, padding1=0.0):
    """Glue: patch extraction + scalar folding + pallas_call. NCHW, N must be 1."""
    N, cin, H1, W1 = x1.shape
    assert N == 1 and cin == C_IN
    N2, cin2, H2, W2 = x2.shape
    assert N2 == 1 and cin2 == C_IN

    H_out = H1 + 4 - KH + 1          # conv1: stride (1,1), pad (2,0)
    W_out = W1 - KW + 1
    H_out2 = (H2 - KH) // 2 + 1      # conv2: stride (2,1), pad 0
    W_out2 = W2 - KW + 1
    assert (H_out, W_out) == (H_out2, W_out2), "branch output shapes must match"
    HW = H_out * W_out
    K = C_IN * KH * KW               # 70 per branch

    f32 = jnp.float32
    inv_other = 1.0 / jnp.asarray(other, f32)
    dn = ("NCHW", "OIHW", "NCHW")

    # im2col for both branches, one op each. Feature order is (c, kh, kw),
    # matching weight.reshape(C_OUT, C_IN*KH*KW) in OIHW order.
    p1 = jax.lax.conv_general_dilated_patches(
        x1.astype(f32), (KH, KW), (1, 1), ((2, 2), (0, 0)),
        dimension_numbers=dn).reshape(K, HW)
    p2 = jax.lax.conv_general_dilated_patches(
        x2.astype(f32), (KH, KW), (2, 1), ((0, 0), (0, 0)),
        dimension_numbers=dn).reshape(K, HW)

    # Extra K rows: ones row (carries the folded bias) and a 0/1 band mask for
    # output rows 11:13 (flat = h*W_out + w), which carries padding1.
    flat = jnp.arange(HW, dtype=jnp.int32)
    band = ((flat >= 11 * W_out) & (flat < 13 * W_out)).astype(f32)[None, :]
    ones = jnp.ones((1, HW), f32)
    patches = jnp.concatenate([p1, p2, ones, band], axis=0)         # (2K+2, HW)

    # Matching weight columns: *3 branch, /other branch, folded bias, padding1.
    w2d = weight.reshape(C_OUT, K).astype(f32)
    b_col = (bias.astype(f32) * (3.0 + inv_other)).reshape(C_OUT, 1)
    pad_col = jnp.full((C_OUT, 1), jnp.asarray(padding1, f32))
    w_ext = jnp.concatenate([w2d * 3.0, w2d * inv_other, b_col, pad_col],
                            axis=1)                                  # (C_OUT, 2K+2)

    vmem = pl.BlockSpec(memory_space=pltpu.MemorySpace.VMEM)
    out = pl.pallas_call(
        model_kernel,
        out_shape=jax.ShapeDtypeStruct((C_OUT, HW), f32),
        in_specs=[vmem, vmem],
        out_specs=vmem,
    )(w_ext, patches)
    return out.reshape(1, C_OUT, H_out, W_out)                      # back to NCHW


def ref_forward(x1, x2, weight, bias, other, padding1):
    """Pure-JAX reference of the (sanitized) PyTorch forward."""
    dn = ("NCHW", "OIHW", "NCHW")
    y1 = jax.lax.conv_general_dilated(
        x1, weight, window_strides=(1, 1), padding=((2, 2), (0, 0)),
        dimension_numbers=dn) + bias[None, :, None, None]
    y2 = jax.lax.conv_general_dilated(
        x2, weight, window_strides=(2, 1), padding=((0, 0), (0, 0)),
        dimension_numbers=dn) + bias[None, :, None, None]
    y3 = y1 * 3.0 + y2 / other
    y3 = y3.at[:, :, 11:13, :].add(padding1)
    return y3


if __name__ == "__main__":
    key = jax.random.PRNGKey(0)
    k1, k2, k3, k4 = jax.random.split(key, 4)

    # Small shapes chosen so that both conv branches produce (1, 3, 16, 16),
    # matching the broadcast requirement of `x1*3 + x2/other`.
    x1 = jax.random.normal(k1, (1, 2, 16, 22), jnp.float32)
    x2 = jax.random.normal(k2, (1, 2, 35, 22), jnp.float32)

    # Deterministic synthetic Conv2d(2, 3, (5, 7)) parameters.
    weight = 0.1 * jax.random.normal(k3, (C_OUT, C_IN, KH, KW), jnp.float32)
    bias = 0.1 * jax.random.normal(k4, (C_OUT,), jnp.float32)

    other = 1.0
    padding1 = 0.5

    fwd = jax.jit(model_forward)
    out = jax.block_until_ready(fwd(x1, x2, weight, bias, other, padding1))

    ref = ref_forward(x1, x2, weight, bias, other, padding1)
    np.testing.assert_allclose(np.asarray(out), np.asarray(ref),
                               rtol=1e-4, atol=5e-4)
    print("KERNEL_OK")
</pallas_src>

<mosaic_0001>
module attributes {stable_mosaic.version = 11 : i64} {
  func.func @model_kernel(%arg0: memref<3x142xf32, #tpu.memory_space<vmem>>, %arg1: memref<142x256xf32, #tpu.memory_space<vmem>>, %arg2: memref<3x256xf32, #tpu.memory_space<vmem>>) attributes {dimension_semantics = [], scalar_prefetch = 0 : i64, scratch_operands = 0 : i64, tpu.core_type = #tpu.core_type<tc>} {
    %c0 = arith.constant 0 : index
    %c0_0 = arith.constant 0 : index
    %0 = vector.load %arg0[%c0, %c0_0] : memref<3x142xf32, #tpu.memory_space<vmem>>, vector<3x142xf32>
    %c0_1 = arith.constant 0 : index
    %c0_2 = arith.constant 0 : index
    %1 = vector.load %arg1[%c0_1, %c0_2] : memref<142x256xf32, #tpu.memory_space<vmem>>, vector<142x256xf32>
    %cst = arith.constant dense<0.000000e+00> : vector<3x256xf32>
    %2 = tpu.matmul %0, %1, %cst {dimension_numbers = #tpu.dot_dimension_numbers<[1], [0], [0], [1], [0, 0, 1, 1], [], []>} : vector<3x142xf32>, vector<142x256xf32>, vector<3x256xf32> -> vector<3x256xf32>
    %c0_3 = arith.constant 0 : index
    %c0_4 = arith.constant 0 : index
    %3 = vector.load %arg2[%c0_3, %c0_4] : memref<3x256xf32, #tpu.memory_space<vmem>>, vector<3x256xf32>
    tpu.vector_store %arg2[%c0_3, %c0_4], %2 {strides = array<i32>} : memref<3x256xf32, #tpu.memory_space<vmem>>, vector<3x256xf32>,
    return
  }
}

</mosaic_0001>

<llo_original>
// kernel: model_forward.1
$region0: #{model_forward.1}
  #allocation0 [shape = 'u32[]', space=smem, size = 0x4, offset = 0x4, fixed_abs, tag = 'smem constant byte address 0x4 - core index']
  #allocation1 [shape = 'u32[144,128]{1,0:T(1,128)}', space=vmem, size = 0x12000, scoped, tag = 'internal scratch']
  %s0 = inlined_call_operand.vmem [shape: f32[3,142], index: 0, kind: input, shape index: {}]
  %s1 = inlined_call_operand.vmem [shape: f32[142,256], index: 1, kind: input, shape index: {}]
  %s2 = inlined_call_operand.vmem [shape: f32[3,256], index: 2, kind: output, shape index: {}]
  %s3 = sld [smem:[#allocation0]]
  $region18: #{model_forward.1} parent=0
    _
  %s5 = ssub.s32 1, %s3
  %s6 = scalar_select 0, %s5, %s3
  // Predicated region
  $region2: #{model_forward.1} parent=0 // pred_check
    _
  $region3: #{model_forward.1} parent=0 // pred_check_branch
    %8 = sbr.rel (0) target = $region5
  $region4: #{model_forward.1} parent=0 // pred_region
    _
  $region5: #{model_forward.1} parent=0 // pred_fallthru
    _
  // Predicated region
  $region6: #{model_forward.1} parent=0 // pred_check
    _
  $region7: #{model_forward.1} parent=0 // pred_check_branch
    %10 = sbr.rel (0) target = $region9
  $region8: #{model_forward.1} parent=0 // pred_region
    _
  $region9: #{model_forward.1} parent=0 // pred_fallthru
    _
  %v11 = vld [vmem:[%s0] sm:$0x77]
  %v12 = vld [vmem:[%s1] sm:$0xff]
  %v13 = vld [vmem:[%s1 + $0x8] sm:$0xff]
  %v14 = vld [vmem:[%s1 + $0x10] sm:$0xff]
  %v15 = vld [vmem:[%s1 + $0x18] sm:$0xff]
  %v16 = vld [vmem:[%s1 + $0x20] sm:$0xff]
  %v17 = vld [vmem:[%s1 + $0x28] sm:$0xff]
  %v18 = vld [vmem:[%s1 + $0x30] sm:$0xff]
  %v19 = vld [vmem:[%s1 + $0x38] sm:$0xff]
  %v20 = vld [vmem:[%s1 + $0x40] sm:$0xff]
  %v21 = vld [vmem:[%s1 + $0x48] sm:$0xff]
  %v22 = vld [vmem:[%s1 + $0x50] sm:$0xff]
  %v23 = vld [vmem:[%s1 + $0x58] sm:$0xff]
  %v24 = vld [vmem:[%s1 + $0x60] sm:$0xff]
  %v25 = vld [vmem:[%s1 + $0x68] sm:$0xff]
  %v26 = vld [vmem:[%s1 + $0x70] sm:$0xff]
  %v27 = vld [vmem:[%s1 + $0x78] sm:$0xff]
  %v28 = vld [vmem:[%s1 + $0x80] sm:$0xff]
  %v29 = vld [vmem:[%s1 + $0x88] sm:$0xff]
  %v30 = vld [vmem:[%s1 + $0x90] sm:$0xff]
  %v31 = vld [vmem:[%s1 + $0x98] sm:$0xff]
  %v32 = vld [vmem:[%s1 + $0xa0] sm:$0xff]
  %v33 = vld [vmem:[%s1 + $0xa8] sm:$0xff]
  %v34 = vld [vmem:[%s1 + $0xb0] sm:$0xff]
  %v35 = vld [vmem:[%s1 + $0xb8] sm:$0xff]
  %v36 = vld [vmem:[%s1 + $0xc0] sm:$0xff]
  %v37 = vld [vmem:[%s1 + $0xc8] sm:$0xff]
  %v38 = vld [vmem:[%s1 + $0xd0] sm:$0xff]
  %v39 = vld [vmem:[%s1 + $0xd8] sm:$0xff]
  %v40 = vld [vmem:[%s1 + $0xe0] sm:$0xff]
  %v41 = vld [vmem:[%s1 + $0xe8] sm:$0xff]
  %v42 = vld [vmem:[%s1 + $0xf0] sm:$0xff]
  %v43 = vld [vmem:[%s1 + $0xf8] sm:$0xff]
  %v44 = vld [vmem:[%s1 + $0x100] sm:$0xff]
  %v45 = vld [vmem:[%s1 + $0x108] sm:$0xff]
  %v46 = vld [vmem:[%s1 + $0x110] sm:$0x3f]
  %v47 = vld [vmem:[%s1 + $0x118] sm:$0x3f]
  %v49 = vcombine.high %v11, %v11
  %vm50 = vcmask 113664
  %v51 = vsel %vm50, %v49, 0
  %vm53 = vcmask 1045504
  %v55 = vsel %vm53, %v46, 0
  %v58 = vsel %vm53, %v47, 0
  %60 = vmatprep.subr.mxu0 %v13
  %61 = vmatpush1.msra.mxu0 %v12
  %62 = vmatprep.subr.mxu0 %v15
  %63 = vmatpush1.msra.mxu0 %v14
  %64 = vmatprep.subr.mxu0 %v17
  %65 = vmatpush1.msra.mxu0 %v16
  %66 = vmatprep.subr.mxu0 %v19
  %67 = vmatpush1.msra.mxu0 %v18
  %68 = vmatprep.subr.mxu0 %v21
  %69 = vmatpush1.msra.mxu0 %v20
  %70 = vmatprep.subr.mxu0 %v23
  %71 = vmatpush1.msra.mxu0 %v22
  %72 = vmatprep.subr.mxu0 %v25
  %73 = vmatpush1.msra.mxu0 %v24
  %74 = vmatprep.subr.mxu0 %v27
  %75 = vmatpush1.msra.mxu0 %v26
  %76 = vmatprep.subr.mxu0 %v29
  %77 = vmatpush1.msra.mxu0 %v28
  %78 = vmatprep.subr.mxu0 %v31
  %79 = vmatpush1.msra.mxu0 %v30
  %80 = vmatprep.subr.mxu0 %v33
  %81 = vmatpush1.msra.mxu0 %v32
  %82 = vmatprep.subr.mxu0 %v35
  %83 = vmatpush1.msra.mxu0 %v34
  %84 = vmatprep.subr.mxu0 %v37
  %85 = vmatpush1.msra.mxu0 %v36
  %86 = vmatprep.subr.mxu0 %v39
  %87 = vmatpush1.msra.mxu0 %v38
  %88 = vmatprep.subr.mxu0 %v41
  %89 = vmatpush1.msra.mxu0 %v40
  %90 = vmatprep.subr.mxu0 %v43
  %91 = vmatpush1.msra.mxu0 %v42
  %92 = vmatprep.subr.mxu0 %v45
  %93 = vmatpush1.msra.mxu0 %v44
  %94 = vmatprep.subr.mxu0 %v58
  %95 = vmatpush1.msra.mxu0 %v55
  %96 = vmatprep.subr.mxu0 0.0
  %97 = vmatpush1.msra.mxu0 0.0
  %98 = vmatprep.subr.mxu0 0.0
  %99 = vmatpush1.msra.mxu0 0.0
  %100 = vmatprep.subr.mxu0 0.0
  %101 = vmatpush1.msra.mxu0 0.0
  %102 = vmatprep.subr.mxu0 0.0
  %103 = vmatpush1.msra.mxu0 0.0
  %104 = vmatprep.subr.mxu0 0.0
  %105 = vmatpush1.msra.mxu0 0.0
  %106 = vmatprep.subr.mxu0 0.0
  %107 = vmatpush1.msra.mxu0 0.0
  %108 = vmatprep.subr.mxu0 0.0
  %109 = vmatpush1.msra.mxu0 0.0
  %110 = vmatprep.subr.mxu0 0.0
  %111 = vmatpush1.msra.mxu0 0.0
  %112 = vmatprep.subr.mxu0 0.0
  %113 = vmatpush1.msra.mxu0 0.0
  %114 = vmatprep.subr.mxu0 0.0
  %115 = vmatpush1.msra.mxu0 0.0
  %116 = vmatprep.subr.mxu0 0.0
  %117 = vmatpush1.msra.mxu0 0.0
  %118 = vmatprep.subr.mxu0 0.0
  %119 = vmatpush1.msra.mxu0 0.0
  %120 = vmatprep.subr.mxu0 0.0
  %121 = vmatpush1.msra.mxu0 0.0
  %122 = vmatprep.subr.mxu0 0.0
  %123 = vmatpush1.msra.mxu0 0.0
  %124 = vmatprep.mubr.f32.mxu0 %v51
  %125 = vmatmul.mubr.f32.gmra.mrb[0].mxu0 %v11
  %v126 = vpop.f32.mrb[0].mxu0
  %v127 = vadd.f32 0.0, %v126
  %v128 = vpop.f32.mrb[0].mxu0
  %v129 = vadd.f32 0.0, %v128
  %130 = vdwg.mxu0
  %v133 = vcombine.low %v127, %v129
  %135 = vst [vmem:[%s2] sm:$0x77] %v133
  // Predicated region
  $region10: #{model_forward.1} parent=0 // pred_check
    _
  $region11: #{model_forward.1} parent=0 // pred_check_branch
    %137 = sbr.rel (0) target = $region13
  $region12: #{model_forward.1} parent=0 // pred_region
    _
  $region13: #{model_forward.1} parent=0 // pred_fallthru
    _
  // Predicated region
  $region14: #{model_forward.1} parent=0 // pred_check
    _
  $region15: #{model_forward.1} parent=0 // pred_check_branch
    %139 = sbr.rel (0) target = $region17
  $region16: #{model_forward.1} parent=0 // pred_region
    _
  $region17: #{model_forward.1} parent=0 // pred_fallthru
    _

</llo_original>
